<compile_context>
chip_gen: v6e
topology: v6e:2x2x1
jax: 0.10.0
libtpu: 0.0.40
codegen_flags: <defaults>
</compile_context>

<pallas_src>
import jax
import jax.numpy as jnp
from jax.experimental import pallas as pl
from jax.experimental.pallas import tpu as pltpu

_LANES = 128


def _make_clip_kernel(width: float, height: float):
    # Plain Python floats -> inlined literals when the kernel is traced.
    w = float(width)
    h = float(height)
    inf = float("inf")

    def kernel(boxes_ref, out_ref):
        b = boxes_ref[...]  # (block_rows, 128) tile
        # Flattened (B, N, 4) row-major: flat index % 4 == lane % 4 because
        # 128 % 4 == 0, so the coordinate id is a pure lane pattern.  Build the
        # bounds on a single (1, 128) row (sublane-broadcast) and clip: 2 VALU
        # ops per data vreg instead of iota/mod/compares/selects per vreg.
        coord = jax.lax.broadcasted_iota(jnp.int32, (1, _LANES), 1) % 4
        lo = jnp.where(coord < 2, 0.0, -inf).astype(b.dtype)   # x1, y1 >= 0
        hi = jnp.where(coord == 2, w,
                       jnp.where(coord == 3, h, inf)).astype(b.dtype)
        out_ref[...] = jnp.minimum(jnp.maximum(b, lo), hi)

    return kernel


def clip_boxes(boxes: jax.Array, img: jax.Array) -> jax.Array:
    """Pallas equivalent of ClipBoxes.forward(boxes, img).

    boxes: (B, N, 4) floating point
    img:   (B, C, H, W) -- only its static H/W are used
    Returns clipped boxes (PyTorch mutates in place; we return a new array).
    """
    _, _, height, width = img.shape
    B, N, four = boxes.shape
    assert four == 4
    dtype = boxes.dtype
    assert jnp.issubdtype(dtype, jnp.floating), "boxes must be floating point"

    total = B * N * 4
    rows = pl.cdiv(total, _LANES)
    needs_pad = rows * _LANES != total  # at most 127 padded elements

    # Sublane alignment of the block depends on dtype packing:
    # 8 rows for f32, 16 for bf16/f16.
    itemsize = jnp.dtype(dtype).itemsize
    sublane = max(8, 32 // itemsize)

    def _align(r):
        return ((r + sublane - 1) // sublane) * sublane

    # ~2 MiB f32 blocks: amortizes the ~0.35us per-grid-step overhead (matters
    # on v7x's 3.2 TB/s HBM) while in+out double buffers (~8 MiB) stay inside
    # v5e's 16 MiB scoped-VMEM default.
    max_block_rows = 4096
    block_rows = min(max_block_rows, _align(rows))
    if block_rows == _align(rows) and block_rows >= 1024:
        # Whole array fits one block but is large: split so the "parallel"
        # grid axis gives both v7x TensorCores work (no-op on v5e/v6e).
        block_rows = _align(pl.cdiv(block_rows, 2))
    grid = (pl.cdiv(rows, block_rows),)  # ragged last block is masked by Pallas

    if needs_pad:
        flat = jnp.pad(boxes.reshape(-1), (0, rows * _LANES - total))
    else:
        flat = boxes.reshape(-1)  # metadata-only for a contiguous input
    boxes2d = flat.reshape(rows, _LANES)

    out2d = pl.pallas_call(
        _make_clip_kernel(width, height),
        out_shape=jax.ShapeDtypeStruct((rows, _LANES), dtype),
        grid_spec=pl.GridSpec(
            grid=grid,
            in_specs=[pl.BlockSpec((block_rows, _LANES), lambda i: (i, 0))],
            out_specs=pl.BlockSpec((block_rows, _LANES), lambda i: (i, 0)),
        ),
        # Alias only when boxes2d is a fresh temporary (padded path); aliasing
        # a reshape view of a non-donated input forces a defensive HBM copy.
        input_output_aliases={0: 0} if needs_pad else {},
        compiler_params=pltpu.CompilerParams(
            dimension_semantics=("parallel",),
        ),
    )(boxes2d)

    if needs_pad:
        return out2d.reshape(-1)[:total].reshape(B, N, 4)
    return out2d.reshape(B, N, 4)


if __name__ == "__main__":
    key = jax.random.PRNGKey(0)
    kb, ki = jax.random.split(key)

    B, C, H, W = 2, 4, 16, 16
    img = jax.random.normal(ki, (B, C, H, W), dtype=jnp.float32)

    def reference(bx):
        r = bx
        r = r.at[:, :, 0].set(jnp.maximum(r[:, :, 0], 0.0))
        r = r.at[:, :, 1].set(jnp.maximum(r[:, :, 1], 0.0))
        r = r.at[:, :, 2].set(jnp.minimum(r[:, :, 2], float(W)))
        r = r.at[:, :, 3].set(jnp.minimum(r[:, :, 3], float(H)))
        return r

    clip = jax.jit(clip_boxes)

    ok = True
    # N=8  -> B*N*4 = 64 (not a multiple of 128): exercises the padded path.
    # N=32 -> B*N*4 = 256: exercises the pad-free fast path.
    for N in (8, 32):
        boxes = jax.random.normal(
            jax.random.fold_in(kb, N), (B, N, 4), dtype=jnp.float32) * 20.0
        out = jax.block_until_ready(clip(boxes, img))
        ref = reference(boxes)
        ok &= (out.shape == boxes.shape) and (out.dtype == boxes.dtype)
        ok &= bool(jnp.allclose(out, ref))
    assert ok, "mismatch vs reference"
    print("KERNEL_OK")
</pallas_src>

<mosaic_0001>
module attributes {stable_mosaic.version = 11 : i64} {
  func.func @kernel(%arg0: i32, %arg1: memref<8x128xf32, #tpu.memory_space<vmem>>, %arg2: memref<8x128xf32, #tpu.memory_space<vmem>>) attributes {dimension_semantics = [#tpu.dimension_semantics<parallel>], iteration_bounds = array<i64: 1>, scalar_prefetch = 0 : i64, scratch_operands = 0 : i64, tpu.core_type = #tpu.core_type<tc>, window_params = [{transform_indices = @transform_0, window_bounds = array<i64: 8, 128>}, {transform_indices = @transform_1, window_bounds = array<i64: 8, 128>}]} {
    %c0 = arith.constant 0 : index
    %c0_0 = arith.constant 0 : index
    %0 = vector.load %arg1[%c0, %c0_0] : memref<8x128xf32, #tpu.memory_space<vmem>>, vector<8x128xf32>
    %1 = tpu.iota {dimensions = array<i32: 1>} : vector<1x128xi32>
    %c4_i32 = arith.constant 4 : i32
    %c0_i32 = arith.constant 0 : i32
    %2 = arith.cmpi eq, %c4_i32, %c0_i32 : i32
    %c1_i32 = arith.constant 1 : i32
    %3 = arith.select %2, %c1_i32, %c4_i32 : i32
    %4 = vector.broadcast %3 : i32 to vector<1x128xi32>
    %5 = arith.remsi %1, %4 : vector<1x128xi32>
    %c0_i32_1 = arith.constant 0 : i32
    %6 = vector.broadcast %c0_i32_1 : i32 to vector<1x128xi32>
    %7 = arith.cmpi ne, %5, %6 : vector<1x128xi32>
    %c0_i32_2 = arith.constant 0 : i32
    %8 = vector.broadcast %c0_i32_2 : i32 to vector<1x128xi32>
    %9 = arith.cmpi slt, %5, %8 : vector<1x128xi32>
    %c0_i32_3 = arith.constant 0 : i32
    %10 = arith.cmpi slt, %3, %c0_i32_3 : i32
    %11 = vector.broadcast %10 : i1 to vector<1x128xi1>
    %12 = vector.broadcast %11 : vector<1x128xi1> to vector<1x128xi1>
    %13 = arith.xori %9, %12 : vector<1x128xi1>
    %14 = arith.andi %13, %7 : vector<1x128xi1>
    %15 = vector.broadcast %3 : i32 to vector<1x128xi32>
    %16 = arith.addi %5, %15 : vector<1x128xi32>
    %17 = arith.select %14, %16, %5 : vector<1x128xi1>, vector<1x128xi32>
    %c2_i32 = arith.constant 2 : i32
    %18 = vector.broadcast %c2_i32 : i32 to vector<1x128xi32>
    %19 = arith.cmpi slt, %17, %18 : vector<1x128xi32>
    %cst = arith.constant 0.000000e+00 : f32
    %cst_4 = arith.constant 0xFF800000 : f32
    %20 = vector.broadcast %cst : f32 to vector<1x128xf32>
    %21 = vector.broadcast %cst_4 : f32 to vector<1x128xf32>
    %22 = arith.select %19, %20, %21 : vector<1x128xi1>, vector<1x128xf32>
    %c2_i32_5 = arith.constant 2 : i32
    %23 = vector.broadcast %c2_i32_5 : i32 to vector<1x128xi32>
    %24 = arith.cmpi eq, %17, %23 : vector<1x128xi32>
    %c3_i32 = arith.constant 3 : i32
    %25 = vector.broadcast %c3_i32 : i32 to vector<1x128xi32>
    %26 = arith.cmpi eq, %17, %25 : vector<1x128xi32>
    %cst_6 = arith.constant 1.600000e+01 : f32
    %cst_7 = arith.constant 0x7F800000 : f32
    %27 = vector.broadcast %cst_6 : f32 to vector<1x128xf32>
    %28 = vector.broadcast %cst_7 : f32 to vector<1x128xf32>
    %29 = arith.select %26, %27, %28 : vector<1x128xi1>, vector<1x128xf32>
    %cst_8 = arith.constant 1.600000e+01 : f32
    %30 = vector.broadcast %cst_8 : f32 to vector<1x128xf32>
    %31 = arith.select %24, %30, %29 : vector<1x128xi1>, vector<1x128xf32>
    %32 = vector.broadcast %22 : vector<1x128xf32> to vector<8x128xf32>
    %33 = arith.maximumf %0, %32 : vector<8x128xf32>
    %34 = vector.broadcast %31 : vector<1x128xf32> to vector<8x128xf32>
    %35 = arith.minimumf %33, %34 : vector<8x128xf32>
    %c0_9 = arith.constant 0 : index
    %c0_10 = arith.constant 0 : index
    %36 = vector.load %arg2[%c0_9, %c0_10] : memref<8x128xf32, #tpu.memory_space<vmem>>, vector<8x128xf32>
    tpu.vector_store %arg2[%c0_9, %c0_10], %35 {strides = array<i32>} : memref<8x128xf32, #tpu.memory_space<vmem>>, vector<8x128xf32>,
    return
  }
  func.func @transform_0(%arg0: i32) -> (i32, i32) {
    %c0_i32 = arith.constant 0 : i32
    %c0_i32_0 = arith.constant 0 : i32
    return %arg0, %c0_i32 : i32, i32
  }
  func.func @transform_1(%arg0: i32) -> (i32, i32) {
    %c0_i32 = arith.constant 0 : i32
    %c0_i32_0 = arith.constant 0 : i32
    return %arg0, %c0_i32 : i32, i32
  }
}

</mosaic_0001>

<llo_original>
// kernel: clip_boxes.1
$region0: #{clip_boxes.1}
  #allocation0 [shape = 'u32[]', space=smem, size = 0x4, offset = 0x4, fixed_abs, tag = 'smem constant byte address 0x4 - core index']
  #allocation1 [shape = 'u32[144,128]{1,0:T(1,128)}', space=vmem, size = 0x12000, scoped, tag = 'internal scratch']
  %s0 = inlined_call_operand.vmem [shape: f32[1,128], index: 0, kind: input, shape index: {}, may-alias: {0,1}]
  %s1 = inlined_call_operand.vmem [shape: f32[1,128], index: 1, kind: output, shape index: {}, may-alias: {0,1}]
  %s2 = sld [smem:[#allocation0]]
  $region44: #{clip_boxes.1} parent=0
    _
  %s4 = ssub.s32 1, %s2
  %s5 = scalar_select 0, %s4, %s2
  $region1: #{clip_boxes.1} parent=0
    #allocation2 [shape = 'u8[4096]{0}', space=vmem, size = 0x1000, scoped, tag = 'output window, operand 0, single buffered']
    // Predicated region
    $region2: #{clip_boxes.1} parent=1 // pred_check
      _
    $region3: #{clip_boxes.1} parent=1 // pred_check_branch
      %7 = sbr.rel (0) target = $region5
    $region4: #{clip_boxes.1} parent=1 // pred_region
      _
    $region5: #{clip_boxes.1} parent=1 // pred_fallthru
      _
    %v8 = vld [vmem:[%s0] sm:$0xff]
    %v9 = vlaneseq
    %v10 = vand.u32 %v9, 127
    %vm11 = vcmp.lt.s32.totalorder %v10, 0
    %v12 = vsub.s32 0, %v10
    %v13 = vsel %vm11, %v12, %v10
    %v14 = vshrl.u32 %v13, 2
    %v15 = vand.u32 %v13, 3
    %v16 = vsub.s32 0, %v15
    %v17 = vsel %vm11, %v16, %v15
    %vm18 = vcmp.ne.s32.totalorder %v17, 0
    %vm19 = vcmp.lt.s32.totalorder %v17, 0
    %vm20 = vmand %vm19, %vm18
    %v21 = vadd.s32 %v17, 4
    %v22 = vsel %vm20, %v21, %v17
    %vm23 = vcmp.lt.s32.totalorder %v22, 2
    %v24 = vsel %vm23, 0.0, -inf
    %vm25 = vcmp.eq.s32.totalorder %v22, 2
    %vm26 = vcmp.eq.s32.totalorder %v22, 3
    %v27 = vsel %vm26, 16.0, inf
    %v28 = vsel %vm25, 16.0, %v27
    %v29 = vmax.f32 %v8, %v24
    %v30 = vmin.f32 %v29, %v28
    %31 = vst [vmem:[#allocation2] sm:$0xff] %v30
    // Predicated region
    $region6: #{clip_boxes.1} parent=1 // pred_check
      _
    $region7: #{clip_boxes.1} parent=1 // pred_check_branch
      %33 = sbr.rel (0) target = $region9
    $region8: #{clip_boxes.1} parent=1 // pred_region
      // Predicated region
      $region10: #{clip_boxes.1} parent=8 // pred_check
        _
      $region11: #{clip_boxes.1} parent=8 // pred_check_branch
        %35 = sbr.rel (0) target = $region13
      $region12: #{clip_boxes.1} parent=8 // pred_region
        // Predicated region
        $region14: #{clip_boxes.1} parent=12 // pred_check
          _
        $region15: #{clip_boxes.1} parent=12 // pred_check_branch
          %37 = sbr.rel target = $region17
        $region16: #{clip_boxes.1} parent=12 // pred_region
          // Predicated region
          $region29: #{clip_boxes.1} parent=16 // pred_check
            _
          $region30: #{clip_boxes.1} parent=16 // pred_check_branch
            %53 = sbr.rel (0) target = $region32
          $region31: #{clip_boxes.1} parent=16 // pred_region
            %s55 = ssub.s32 2, 1
            loop: start=0, step=1, limit=1
            $region33: #{clip_boxes.1} parent=31 // loop_pre_header
              _
            $region34: #{clip_boxes.1} parent=31 // loop_header
              %s57 = sphi 0, %s61
              %p58 = scmp.ge.s32.totalorder %s57, 1
              %s62 = sphi [#allocation2], [#allocation2]
              %s63 = sphi %s1, %s1
            $region35: #{clip_boxes.1} parent=31 // loop_header_branch
              %60 = sbr.rel (%p58) target = $region39
            $region36: #{clip_boxes.1} parent=31 // loop_body
              %v64 = vld [vmem:[%s62] sm:%s55]
              %65 = vst [vmem:[%s63] sm:%s55] %v64
            $region37: #{clip_boxes.1} parent=31 // loop_footer
              %s61 = sadd.s32 1, %s57
            $region38: #{clip_boxes.1} parent=31 // loop_footer_branch
              %56 = sbr.rel target = $region34
            $region39: #{clip_boxes.1} parent=31 // loop_exit
              _
          $region32: #{clip_boxes.1} parent=16 // pred_fallthru
            _
        $region17: #{clip_boxes.1} parent=12 // pred_fallthru
          _
        // Predicated region
        $region18: #{clip_boxes.1} parent=12 // pred_check
          _
        $region19: #{clip_boxes.1} parent=12 // pred_check_branch
          %39 = sbr.rel (0) target = $region21
        $region20: #{clip_boxes.1} parent=12 // pred_region
          %s41 = ssub.s32 2, 1
          loop: start=0, step=1, limit=1
          $region22: #{clip_boxes.1} parent=20 // loop_pre_header
            _
          $region23: #{clip_boxes.1} parent=20 // loop_header
            %s43 = sphi 0, %s47
            %p44 = scmp.ge.s32.totalorder %s43, 1
            %s48 = sphi [#allocation2], [#allocation2]
            %s49 = sphi %s1, %s1
          $region24: #{clip_boxes.1} parent=20 // loop_header_branch
            %46 = sbr.rel (%p44) target = $region28
          $region25: #{clip_boxes.1} parent=20 // loop_body
            %v50 = vld [vmem:[%s48] sm:%s41]
            %51 = vst [vmem:[%s49] sm:%s41] %v50
          $region26: #{clip_boxes.1} parent=20 // loop_footer
            %s47 = sadd.s32 1, %s43
          $region27: #{clip_boxes.1} parent=20 // loop_footer_branch
            %42 = sbr.rel target = $region23
          $region28: #{clip_boxes.1} parent=20 // loop_exit
            _
        $region21: #{clip_boxes.1} parent=12 // pred_fallthru
          _
      $region13: #{clip_boxes.1} parent=8 // pred_fallthru
        _
      %66 = vnop
    $region9: #{clip_boxes.1} parent=1 // pred_fallthru
      _
    // Predicated region
    $region40: #{clip_boxes.1} parent=1 // pred_check
      _
    $region41: #{clip_boxes.1} parent=1 // pred_check_branch
      %68 = sbr.rel (0) target = $region43
    $region42: #{clip_boxes.1} parent=1 // pred_region
      _
    $region43: #{clip_boxes.1} parent=1 // pred_fallthru
      _

</llo_original>
